<compile_context>
chip_gen: v6e
topology: v6e:2x2x1
jax: 0.10.0
libtpu: 0.0.40
codegen_flags: <defaults>
</compile_context>

<pallas_src>
import functools

import jax
import jax.numpy as jnp
from jax.experimental import pallas as pl
from jax.experimental.pallas import tpu as pltpu


# ----------------------------------------------------------------------------
# Fused kernel: y = (relu(x @ W1 + b1)) @ W2 + b2       (Dropout = identity)
# ----------------------------------------------------------------------------
def _gene_recover_kernel(x_ref, w1_ref, b1_ref, w2_ref, b2_ref, o_ref,
                         *, weight_dtype):
    x = x_ref[...]                                           # (tile_n, d_in_p) f32
    h = jnp.dot(x.astype(weight_dtype), w1_ref[...],
                preferred_element_type=jnp.float32)          # bf16 MXU, f32 acc
    h = h + b1_ref[...]
    h = jnp.maximum(h, 0.0)                                  # ReLU (VPU, f32)
    # TODO(synk): training-mode Dropout(0.25) would need pltpu.prng_*; eval = identity.
    y = jnp.dot(h.astype(weight_dtype), w2_ref[...],
                preferred_element_type=jnp.float32)
    o_ref[...] = y + b2_ref[...]                             # lane-dense f32 store


# ----------------------------------------------------------------------------
# Wrapper: padding, tiling, pallas_call
# ----------------------------------------------------------------------------
def _round_up(x, m):
    return (x + m - 1) // m * m


def _pad2d(a, rows, cols, dtype):
    return jnp.pad(a.astype(dtype), ((0, rows - a.shape[0]), (0, cols - a.shape[1])))


def gene_recover(x, w1, b1, w2, b2, *, tile_n=256, weight_dtype=jnp.bfloat16):
    """GeneRecover forward.  x: (..., hidden[0]) -> (..., output_dim)."""
    d_in, h = w1.shape
    h2, d_out = w2.shape
    assert h == h2, (w1.shape, w2.shape)
    orig_lead = x.shape[:-1]
    assert x.shape[-1] == d_in, (x.shape, d_in)

    x2 = x.reshape(-1, d_in).astype(jnp.float32)
    n = x2.shape[0]

    # Lane-dense padding: feature dims -> multiples of 128, rows -> tile multiple (>=8).
    d_in_p = _round_up(d_in, 128)
    h_p = _round_up(h, 128)
    d_out_p = _round_up(d_out, 128)
    tile_n = min(tile_n, _round_up(n, 8))
    n_p = _round_up(n, tile_n)

    xp = jnp.pad(x2, ((0, n_p - n), (0, d_in_p - d_in)))
    w1p = _pad2d(w1, d_in_p, h_p, weight_dtype)
    w2p = _pad2d(w2, h_p, d_out_p, weight_dtype)
    b1p = jnp.pad(b1.astype(jnp.float32), (0, h_p - h)).reshape(1, h_p)
    b2p = jnp.pad(b2.astype(jnp.float32), (0, d_out_p - d_out)).reshape(1, d_out_p)

    # VMEM budget: resident weights/bias + double-buffered in/out tiles + hidden.
    w_bytes = (d_in_p * h_p + h_p * d_out_p) * jnp.dtype(weight_dtype).itemsize
    b_bytes = (h_p + d_out_p) * 4
    tile_bytes = (2 * tile_n * d_in_p + 2 * tile_n * d_out_p + tile_n * h_p) * 4
    vmem_limit = int(min(64 << 20, max(2 * (w_bytes + b_bytes + tile_bytes), 16 << 20)))

    out = pl.pallas_call(
        functools.partial(_gene_recover_kernel, weight_dtype=weight_dtype),
        out_shape=jax.ShapeDtypeStruct((n_p, d_out_p), jnp.float32),
        grid=(n_p // tile_n,),
        in_specs=[
            pl.BlockSpec((tile_n, d_in_p), lambda i: (i, 0)),   # activations: tiled rows
            pl.BlockSpec((d_in_p, h_p), lambda i: (0, 0)),      # W1: resident
            pl.BlockSpec((1, h_p), lambda i: (0, 0)),           # b1: resident
            pl.BlockSpec((h_p, d_out_p), lambda i: (0, 0)),     # W2: resident
            pl.BlockSpec((1, d_out_p), lambda i: (0, 0)),       # b2: resident
        ],
        out_specs=pl.BlockSpec((tile_n, d_out_p), lambda i: (i, 0)),
        compiler_params=pltpu.CompilerParams(
            dimension_semantics=("parallel",),
            vmem_limit_bytes=vmem_limit,
        ),
    )(xp, w1p, b1p, w2p, b2p)

    return out[:n, :d_out].reshape(*orig_lead, d_out)


# ----------------------------------------------------------------------------
# Parameter construction (PyTorch nn.Linear-like init; weights stored (in, out))
# ----------------------------------------------------------------------------
def _make_linear(key, fan_in, fan_out):
    kw, kb = jax.random.split(key)
    bound = 1.0 / jnp.sqrt(jnp.float32(fan_in))
    w = jax.random.uniform(kw, (fan_in, fan_out), jnp.float32, -bound, bound)
    b = jax.random.uniform(kb, (fan_out,), jnp.float32, -bound, bound)
    return w, b


def init_gene_recover_params(key, output_dim, hidden_size=(512, 256)):
    h0, h1 = hidden_size
    k1, k2 = jax.random.split(key)
    w1, b1 = _make_linear(k1, h0, h1)       # Reg_Block: Linear(h0, h1) + ReLU + Dropout
    w2, b2 = _make_linear(k2, h1, output_dim)
    return {"w1": w1, "b1": b1, "w2": w2, "b2": b2}


# ----------------------------------------------------------------------------
# Demo
# ----------------------------------------------------------------------------
if __name__ == "__main__":
    # Small shapes consistent with the module (hidden_size=[h0, h1], output_dim).
    hidden_size = (64, 32)
    output_dim = 48
    n_rows = 16

    key = jax.random.PRNGKey(0)
    kp, kx = jax.random.split(key)
    params = init_gene_recover_params(kp, output_dim, hidden_size)

    x = jax.random.normal(kx, (1, n_rows, hidden_size[0]), jnp.float32)

    y = gene_recover(x, params["w1"], params["b1"], params["w2"], params["b2"])
    y = jax.block_until_ready(y)
    assert y.shape == (1, n_rows, output_dim)

    # Pure-JAX reference with matching bf16-weight / f32-accumulate numerics.
    def ref_fn(x, w1, b1, w2, b2):
        x2 = x.reshape(-1, x.shape[-1]).astype(jnp.bfloat16)
        h = jnp.dot(x2, w1.astype(jnp.bfloat16),
                    preferred_element_type=jnp.float32) + b1
        h = jnp.maximum(h, 0.0)
        out = jnp.dot(h.astype(jnp.bfloat16), w2.astype(jnp.bfloat16),
                      preferred_element_type=jnp.float32) + b2
        return out.reshape(*x.shape[:-1], w2.shape[1])

    y_ref = jax.block_until_ready(
        ref_fn(x, params["w1"], params["b1"], params["w2"], params["b2"]))

    assert jnp.allclose(y, y_ref, rtol=5e-3, atol=5e-3), (
        float(jnp.max(jnp.abs(y - y_ref))))

    print("KERNEL_OK")
</pallas_src>

<mosaic_0001>
module attributes {stable_mosaic.version = 11 : i64} {
  func.func @_gene_recover_kernel(%arg0: i32, %arg1: memref<16x128xf32, #tpu.memory_space<vmem>>, %arg2: memref<128x128xbf16, #tpu.memory_space<vmem>>, %arg3: memref<1x128xf32, #tpu.memory_space<vmem>>, %arg4: memref<128x128xbf16, #tpu.memory_space<vmem>>, %arg5: memref<1x128xf32, #tpu.memory_space<vmem>>, %arg6: memref<16x128xf32, #tpu.memory_space<vmem>>) attributes {dimension_semantics = [#tpu.dimension_semantics<parallel>], iteration_bounds = array<i64: 1>, scalar_prefetch = 0 : i64, scratch_operands = 0 : i64, tpu.core_type = #tpu.core_type<tc>, window_params = [{transform_indices = @transform_0, window_bounds = array<i64: 16, 128>}, {pipeline_mode = #tpu.pipeline_mode<synchronous>, transform_indices = @transform_1, window_bounds = array<i64: 128, 128>}, {pipeline_mode = #tpu.pipeline_mode<synchronous>, transform_indices = @transform_2, window_bounds = array<i64: 1, 128>}, {pipeline_mode = #tpu.pipeline_mode<synchronous>, transform_indices = @transform_3, window_bounds = array<i64: 128, 128>}, {pipeline_mode = #tpu.pipeline_mode<synchronous>, transform_indices = @transform_4, window_bounds = array<i64: 1, 128>}, {transform_indices = @transform_5, window_bounds = array<i64: 16, 128>}]} {
    %c0 = arith.constant 0 : index
    %c0_0 = arith.constant 0 : index
    %0 = vector.load %arg1[%c0, %c0_0] : memref<16x128xf32, #tpu.memory_space<vmem>>, vector<16x128xf32>
    %1 = arith.truncf %0 : vector<16x128xf32> to vector<16x128xbf16>
    %c0_1 = arith.constant 0 : index
    %c0_2 = arith.constant 0 : index
    %2 = vector.load %arg2[%c0_1, %c0_2] : memref<128x128xbf16, #tpu.memory_space<vmem>>, vector<128x128xbf16>
    %cst = arith.constant dense<0.000000e+00> : vector<16x128xf32>
    %3 = tpu.matmul %1, %2, %cst {dimension_numbers = #tpu.dot_dimension_numbers<[1], [0], [0], [1], [0, 0, 1, 1], [], []>} : vector<16x128xbf16>, vector<128x128xbf16>, vector<16x128xf32> -> vector<16x128xf32>
    %c0_3 = arith.constant 0 : index
    %c0_4 = arith.constant 0 : index
    %4 = vector.load %arg3[%c0_3, %c0_4] : memref<1x128xf32, #tpu.memory_space<vmem>>, vector<1x128xf32>
    %5 = vector.broadcast %4 : vector<1x128xf32> to vector<16x128xf32>
    %6 = arith.addf %3, %5 : vector<16x128xf32>
    %cst_5 = arith.constant 0.000000e+00 : f32
    %7 = vector.broadcast %cst_5 : f32 to vector<16x128xf32>
    %8 = arith.maximumf %6, %7 : vector<16x128xf32>
    %9 = arith.truncf %8 : vector<16x128xf32> to vector<16x128xbf16>
    %c0_6 = arith.constant 0 : index
    %c0_7 = arith.constant 0 : index
    %10 = vector.load %arg4[%c0_6, %c0_7] : memref<128x128xbf16, #tpu.memory_space<vmem>>, vector<128x128xbf16>
    %cst_8 = arith.constant dense<0.000000e+00> : vector<16x128xf32>
    %11 = tpu.matmul %9, %10, %cst_8 {dimension_numbers = #tpu.dot_dimension_numbers<[1], [0], [0], [1], [0, 0, 1, 1], [], []>} : vector<16x128xbf16>, vector<128x128xbf16>, vector<16x128xf32> -> vector<16x128xf32>
    %c0_9 = arith.constant 0 : index
    %c0_10 = arith.constant 0 : index
    %12 = vector.load %arg5[%c0_9, %c0_10] : memref<1x128xf32, #tpu.memory_space<vmem>>, vector<1x128xf32>
    %13 = vector.broadcast %12 : vector<1x128xf32> to vector<16x128xf32>
    %14 = arith.addf %11, %13 : vector<16x128xf32>
    %c0_11 = arith.constant 0 : index
    %c0_12 = arith.constant 0 : index
    %15 = vector.load %arg6[%c0_11, %c0_12] : memref<16x128xf32, #tpu.memory_space<vmem>>, vector<16x128xf32>
    tpu.vector_store %arg6[%c0_11, %c0_12], %14 {strides = array<i32>} : memref<16x128xf32, #tpu.memory_space<vmem>>, vector<16x128xf32>,
    return
  }
  func.func @transform_0(%arg0: i32) -> (i32, i32) {
    %c0_i32 = arith.constant 0 : i32
    %c0_i32_0 = arith.constant 0 : i32
    return %arg0, %c0_i32 : i32, i32
  }
  func.func @transform_1(%arg0: i32) -> (i32, i32) {
    %c0_i32 = arith.constant 0 : i32
    %c0_i32_0 = arith.constant 0 : i32
    %c0_i32_1 = arith.constant 0 : i32
    return %c0_i32, %c0_i32_0 : i32, i32
  }
  func.func @transform_2(%arg0: i32) -> (i32, i32) {
    %c0_i32 = arith.constant 0 : i32
    %c0_i32_0 = arith.constant 0 : i32
    %c0_i32_1 = arith.constant 0 : i32
    return %c0_i32, %c0_i32_0 : i32, i32
  }
  func.func @transform_3(%arg0: i32) -> (i32, i32) {
    %c0_i32 = arith.constant 0 : i32
    %c0_i32_0 = arith.constant 0 : i32
    %c0_i32_1 = arith.constant 0 : i32
    return %c0_i32, %c0_i32_0 : i32, i32
  }
  func.func @transform_4(%arg0: i32) -> (i32, i32) {
    %c0_i32 = arith.constant 0 : i32
    %c0_i32_0 = arith.constant 0 : i32
    %c0_i32_1 = arith.constant 0 : i32
    return %c0_i32, %c0_i32_0 : i32, i32
  }
  func.func @transform_5(%arg0: i32) -> (i32, i32) {
    %c0_i32 = arith.constant 0 : i32
    %c0_i32_0 = arith.constant 0 : i32
    return %arg0, %c0_i32 : i32, i32
  }
}

</mosaic_0001>

<llo_original>
// kernel: tpu_custom_call.1
$region0: #{tpu_custom_call.1}
  #allocation0 [shape = 'u32[]', space=smem, size = 0x4, offset = 0x4, fixed_abs, tag = 'smem constant byte address 0x4 - core index']
  #allocation1 [shape = 'u32[144,128]{1,0:T(1,128)}', space=vmem, size = 0x12000, scoped, tag = 'internal scratch']
  %s0 = inlined_call_operand.hbm [shape: f32[16,128], index: 0, kind: input, shape index: {}]
  %s1 = inlined_call_operand.hbm [shape: bf16[128,128], index: 1, kind: input, shape index: {}]
  %s2 = inlined_call_operand.vmem [shape: f32[1,128], index: 2, kind: input, shape index: {}]
  %s3 = inlined_call_operand.hbm [shape: bf16[128,128], index: 3, kind: input, shape index: {}]
  %s4 = inlined_call_operand.vmem [shape: f32[1,128], index: 4, kind: input, shape index: {}]
  %s5 = inlined_call_operand.hbm [shape: f32[16,128], index: 5, kind: output, shape index: {}]
  %s6 = sld [smem:[#allocation0]]
  $region42: #{tpu_custom_call.1} parent=0
    _
  %s8 = ssub.s32 1, %s6
  %s9 = scalar_select 0, %s8, %s6
  $region1: #{tpu_custom_call.1} parent=0
    #allocation2 [shape = 'u8[8192]{0}', space=vmem, size = 0x2000, scoped, tag = 'input window, operand 0, single buffered']
    #allocation3 [shape = 's32[1]{0}', space=sflag, size = 0x4, scoped, tag = 'scoped memory for tpu_custom_call.1']
    #allocation4 [shape = 's32[1]{0}', space=sflag, size = 0x4, scoped, tag = 'scoped memory for tpu_custom_call.1']
    #allocation5 [shape = 'u8[32768]{0}', space=vmem, size = 0x8000, scoped, tag = 'input window, operand 1, single buffered']
    #allocation6 [shape = 's32[1]{0}', space=sflag, size = 0x4, scoped, tag = 'scoped memory for tpu_custom_call.1']
    #allocation7 [shape = 'u8[32768]{0}', space=vmem, size = 0x8000, scoped, tag = 'input window, operand 3, single buffered']
    #allocation8 [shape = 'u8[8192]{0}', space=vmem, size = 0x2000, scoped, tag = 'output window, operand 0, single buffered']
    %10 = vsyncpa [#allocation3], 0
    %11 = vsyncpa [#allocation6], 0
    %12 = vsyncpa [#allocation4], 0
    // Predicated region
    $region2: #{tpu_custom_call.1} parent=1 // pred_check
      _
    $region3: #{tpu_custom_call.1} parent=1 // pred_check_branch
      %14 = sbr.rel (0) target = $region5
    $region4: #{tpu_custom_call.1} parent=1 // pred_region
      %s16 = ssub.s32 256, 256
      %17 = vsyncadd [#allocation3], %s16
      %s18 = sshll.u32 [#allocation2], 4
      %s19 = int_to_ptr.vmem [resolvable:$true] %s18
      %24 = dma.hbm_to_vmem [thread:$0]  %s0, 256, %s19, [#allocation3], 128, 128, 8
    $region5: #{tpu_custom_call.1} parent=1 // pred_fallthru
      _
    // Predicated region
    $region6: #{tpu_custom_call.1} parent=1 // pred_check
      _
    $region7: #{tpu_custom_call.1} parent=1 // pred_check_branch
      %26 = sbr.rel (0) target = $region9
    $region8: #{tpu_custom_call.1} parent=1 // pred_region
      %s28 = ssub.s32 1024, 1024
      %29 = vsyncadd [#allocation6], %s28
      %s30 = sshll.u32 [#allocation5], 4
      %s31 = int_to_ptr.vmem [resolvable:$true] %s30
      %36 = dma.hbm_to_vmem [thread:$0]  %s1, 1024, %s31, [#allocation6], 64, 64, 4
    $region9: #{tpu_custom_call.1} parent=1 // pred_fallthru
      _
    // Predicated region
    $region10: #{tpu_custom_call.1} parent=1 // pred_check
      _
    $region11: #{tpu_custom_call.1} parent=1 // pred_check_branch
      %38 = sbr.rel (0) target = $region13
    $region12: #{tpu_custom_call.1} parent=1 // pred_region
      _
    $region13: #{tpu_custom_call.1} parent=1 // pred_fallthru
      _
    // Predicated region
    $region14: #{tpu_custom_call.1} parent=1 // pred_check
      _
    $region15: #{tpu_custom_call.1} parent=1 // pred_check_branch
      %40 = sbr.rel (0) target = $region17
    $region16: #{tpu_custom_call.1} parent=1 // pred_region
      %s42 = ssub.s32 1024, 1024
      %43 = vsyncadd [#allocation6], %s42
      %s44 = sshll.u32 [#allocation7], 4
      %s45 = int_to_ptr.vmem [resolvable:$true] %s44
      %50 = dma.hbm_to_vmem [thread:$0]  %s3, 1024, %s45, [#allocation6], 64, 64, 4
    $region17: #{tpu_custom_call.1} parent=1 // pred_fallthru
      _
    // Predicated region
    $region18: #{tpu_custom_call.1} parent=1 // pred_check
      _
    $region19: #{tpu_custom_call.1} parent=1 // pred_check_branch
      %52 = sbr.rel (0) target = $region21
    $region20: #{tpu_custom_call.1} parent=1 // pred_region
      _
    $region21: #{tpu_custom_call.1} parent=1 // pred_fallthru
      _
    // Predicated region
    $region22: #{tpu_custom_call.1} parent=1 // pred_check
      _
    $region23: #{tpu_custom_call.1} parent=1 // pred_check_branch
      %54 = sbr.rel (0) target = $region25
    $region24: #{tpu_custom_call.1} parent=1 // pred_region
      %55 = dma.done [#allocation3], 256
    $region25: #{tpu_custom_call.1} parent=1 // pred_fallthru
      _
    // Predicated region
    $region26: #{tpu_custom_call.1} parent=1 // pred_check
      _
    $region27: #{tpu_custom_call.1} parent=1 // pred_check_branch
      %57 = sbr.rel (0) target = $region29
    $region28: #{tpu_custom_call.1} parent=1 // pred_region
      %58 = dma.done [#allocation6], 1024
    $region29: #{tpu_custom_call.1} parent=1 // pred_fallthru
      _
    // Predicated region
    $region30: #{tpu_custom_call.1} parent=1 // pred_check
      _
    $region31: #{tpu_custom_call.1} parent=1 // pred_check_branch
      %60 = sbr.rel (0) target = $region33
    $region32: #{tpu_custom_call.1} parent=1 // pred_region
      %61 = dma.done [#allocation6], 1024
    $region33: #{tpu_custom_call.1} parent=1 // pred_fallthru
      _
    %v63 = vld [vmem:[#allocation2] sm:$0xff]
    %v64 = vld [vmem:[#allocation2 + $0x8] sm:$0xff]
    %v65 = vpack.c.bf16 %v64, %v63
    %v66 = vld [vmem:[#allocation5] sm:$0xf]
    %v67 = vld [vmem:[#allocation5 + $0x4] sm:$0xf]
    %v68 = vld [vmem:[#allocation5 + $0x8] sm:$0xf]
    %v69 = vld [vmem:[#allocation5 + $0xc] sm:$0xf]
    %v70 = vld [vmem:[#allocation5 + $0x10] sm:$0xf]
    %v71 = vld [vmem:[#allocation5 + $0x14] sm:$0xf]
    %v72 = vld [vmem:[#allocation5 + $0x18] sm:$0xf]
    %v73 = vld [vmem:[#allocation5 + $0x1c] sm:$0xf]
    %v74 = vld [vmem:[#allocation5 + $0x20] sm:$0xf]
    %v75 = vld [vmem:[#allocation5 + $0x24] sm:$0xf]
    %v76 = vld [vmem:[#allocation5 + $0x28] sm:$0xf]
    %v77 = vld [vmem:[#allocation5 + $0x2c] sm:$0xf]
    %v78 = vld [vmem:[#allocation5 + $0x30] sm:$0xf]
    %v79 = vld [vmem:[#allocation5 + $0x34] sm:$0xf]
    %v80 = vld [vmem:[#allocation5 + $0x38] sm:$0xf]
    %v81 = vld [vmem:[#allocation5 + $0x3c] sm:$0xf]
    %v82 = vld [vmem:[%s2] sm:$0x1]
    %v84 = vlaneseq
    %v85 = vshrl.u32 %v84, 7
    %v86 = vsub.s32 0, %v85
    %v87 = vrot.slane %v82, %v86
    %v105 = vunpack.c.l.b16 %v66
    %v106 = vunpack.c.l.b16 %v67
    %v107 = vunpack.c.l.b16 %v68
    %v108 = vunpack.c.l.b16 %v69
    %v109 = vunpack.c.l.b16 %v70
    %v110 = vunpack.c.l.b16 %v71
    %v111 = vunpack.c.l.b16 %v72
    %v112 = vunpack.c.l.b16 %v73
    %v113 = vunpack.c.l.b16 %v74
    %v114 = vunpack.c.l.b16 %v75
    %v115 = vunpack.c.l.b16 %v76
    %v116 = vunpack.c.l.b16 %v77
    %v117 = vunpack.c.l.b16 %v78
    %v118 = vunpack.c.l.b16 %v79
    %v119 = vunpack.c.l.b16 %v80
    %v120 = vunpack.c.l.b16 %v81
    %v121 = vpack.c.b16 %v106, %v105
    %v122 = vpack.c.b16 %v108, %v107
    %v123 = vpack.c.b16 %v110, %v109
    %v124 = vpack.c.b16 %v112, %v111
    %v125 = vpack.c.b16 %v114, %v113
    %v126 = vpack.c.b16 %v116, %v115
    %v127 = vpack.c.b16 %v118, %v117
    %v128 = vpack.c.b16 %v120, %v119
    %137 = vmatprep.subr.bf16.mxu0 0
    %138 = vmatpush1.bf16.msra.mxu0 %v128
    %139 = vmatprep.subr.bf16.mxu0 0
    %140 = vmatpush1.bf16.msra.mxu0 %v127
    %141 = vmatprep.subr.bf16.mxu0 0
    %142 = vmatpush1.bf16.msra.mxu0 %v126
    %143 = vmatprep.subr.bf16.mxu0 0
    %144 = vmatpush1.bf16.msra.mxu0 %v125
    %145 = vmatprep.subr.bf16.mxu0 0
    %146 = vmatpush1.bf16.msra.mxu0 %v124
    %147 = vmatprep.subr.bf16.mxu0 0
    %148 = vmatpush1.bf16.msra.mxu0 %v123
    %149 = vmatprep.subr.bf16.mxu0 0
    %150 = vmatpush1.bf16.msra.mxu0 %v122
    %151 = vmatprep.subr.bf16.mxu0 0
    %152 = vmatpush1.bf16.msra.mxu0 %v121
    %153 = vmatprep.subr.bf16.mxu0 0
    %154 = vmatpush2.bf16.msra.mxu0 0
    %155 = vmatprep.subr.bf16.mxu0 0
    %156 = vmatpush2.bf16.msra.mxu0 0
    %157 = vmatprep.subr.bf16.mxu0 0
    %158 = vmatpush2.bf16.msra.mxu0 0
    %159 = vmatprep.subr.bf16.mxu0 0
    %160 = vmatpush2.bf16.msra.mxu0 0
    %161 = vmatprep.subr.bf16.mxu0 0
    %162 = vmatpush2.bf16.msra.mxu0 0
    %163 = vmatprep.subr.bf16.mxu0 0
    %164 = vmatpush2.bf16.msra.mxu0 0
    %165 = vmatprep.subr.bf16.mxu0 0
    %166 = vmatpush2.bf16.msra.mxu0 0
    %167 = vmatprep.subr.bf16.mxu0 0
    %168 = vmatpush2.bf16.msra.mxu0 0
    %169 = vmatprep.mubr.bf16.mxu0 0
    %170 = vmatmul.mubr.bf16.gmra.mxu0 %v65
    %v171 = vpop.f32.mrf.mxu0
    %v172 = vadd.f32 %v87, %v171
    %v173 = vpop.f32.mrf.mxu0
    %v174 = vpop.f32.mrf.mxu0
    %v175 = vadd.f32 %v87, %v174
    %v176 = vpop.f32.mrf.mxu0
    %177 = vdwg.mxu0
    %v178 = vmax.f32 %v172, 0.0
    %v179 = vmax.f32 %v175, 0.0
    %v180 = vpack.c.bf16 %v179, %v178
    %v181 = vld [vmem:[#allocation7] sm:$0xf]
    %v182 = vld [vmem:[#allocation7 + $0x4] sm:$0xf]
    %v183 = vld [vmem:[#allocation7 + $0x8] sm:$0xf]
    %v184 = vld [vmem:[#allocation7 + $0xc] sm:$0xf]
    %v185 = vld [vmem:[#allocation7 + $0x10] sm:$0xf]
    %v186 = vld [vmem:[#allocation7 + $0x14] sm:$0xf]
    %v187 = vld [vmem:[#allocation7 + $0x18] sm:$0xf]
    %v188 = vld [vmem:[#allocation7 + $0x1c] sm:$0xf]
    %v189 = vld [vmem:[#allocation7 + $0x20] sm:$0xf]
    %v190 = vld [vmem:[#allocation7 + $0x24] sm:$0xf]
    %v191 = vld [vmem:[#allocation7 + $0x28] sm:$0xf]
    %v192 = vld [vmem:[#allocation7 + $0x2c] sm:$0xf]
    %v193 = vld [vmem:[#allocation7 + $0x30] sm:$0xf]
    %v194 = vld [vmem:[#allocation7 + $0x34] sm:$0xf]
    %v195 = vld [vmem:[#allocation7 + $0x38] sm:$0xf]
    %v196 = vld [vmem:[#allocation7 + $0x3c] sm:$0xf]
    %v197 = vld [vmem:[%s4] sm:$0x1]
    %v199 = vlaneseq
    %v200 = vshrl.u32 %v199, 7
    %v201 = vsub.s32 0, %v200
    %v202 = vrot.slane %v197, %v201
    %v220 = vunpack.c.l.b16 %v181
    %v221 = vunpack.c.l.b16 %v182
    %v222 = vunpack.c.l.b16 %v183
    %v223 = vunpack.c.l.b16 %v184
    %v224 = vunpack.c.l.b16 %v185
    %v225 = vunpack.c.l.b16 %v186
    %v226 = vunpack.c.l.b16 %v187
    %v227 = vunpack.c.l.b16 %v188
    %v228 = vunpack.c.l.b16 %v189
    %v229 = vunpack.c.l.b16 %v190
    %v230 = vunpack.c.l.b16 %v191
    %v231 = vunpack.c.l.b16 %v192
    %v232 = vunpack.c.l.b16 %v193
    %v233 = vunpack.c.l.b16 %v194
    %v234 = vunpack.c.l.b16 %v195
    %v235 = vunpack.c.l.b16 %v196
    %v236 = vpack.c.b16 %v221, %v220
    %v237 = vpack.c.b16 %v223, %v222
    %v238 = vpack.c.b16 %v225, %v224
    %v239 = vpack.c.b16 %v227, %v226
    %v240 = vpack.c.b16 %v229, %v228
    %v241 = vpack.c.b16 %v231, %v230
    %v242 = vpack.c.b16 %v233, %v232
    %v243 = vpack.c.b16 %v235, %v234
    %252 = vmatprep.subr.bf16.mxu0 0
    %253 = vmatpush1.bf16.msra.mxu0 %v243
    %254 = vmatprep.subr.bf16.mxu0 0
    %255 = vmatpush1.bf16.msra.mxu0 %v242
    %256 = vmatprep.subr.bf16.mxu0 0
    %257 = vmatpush1.bf16.msra.mxu0 %v241
    %258 = vmatprep.subr.bf16.mxu0 0
    %259 = vmatpush1.bf16.msra.mxu0 %v240
    %260 = vmatprep.subr.bf16.mxu0 0
    %261 = vmatpush1.bf16.msra.mxu0 %v239
    %262 = vmatprep.subr.bf16.mxu0 0
    %263 = vmatpush1.bf16.msra.mxu0 %v238
    %264 = vmatprep.subr.bf16.mxu0 0
    %265 = vmatpush1.bf16.msra.mxu0 %v237
    %266 = vmatprep.subr.bf16.mxu0 0
    %267 = vmatpush1.bf16.msra.mxu0 %v236
    %268 = vmatprep.subr.bf16.mxu0 0
    %269 = vmatpush2.bf16.msra.mxu0 0
    %270 = vmatprep.subr.bf16.mxu0 0
    %271 = vmatpush2.bf16.msra.mxu0 0
    %272 = vmatprep.subr.bf16.mxu0 0
    %273 = vmatpush2.bf16.msra.mxu0 0
    %274 = vmatprep.subr.bf16.mxu0 0
    %275 = vmatpush2.bf16.msra.mxu0 0
    %276 = vmatprep.subr.bf16.mxu0 0
    %277 = vmatpush2.bf16.msra.mxu0 0
    %278 = vmatprep.subr.bf16.mxu0 0
    %279 = vmatpush2.bf16.msra.mxu0 0
    %280 = vmatprep.subr.bf16.mxu0 0
    %281 = vmatpush2.bf16.msra.mxu0 0
    %282 = vmatprep.subr.bf16.mxu0 0
    %283 = vmatpush2.bf16.msra.mxu0 0
    %284 = vmatprep.mubr.bf16.mxu0 0
    %285 = vmatmul.mubr.bf16.gmra.mxu0 %v180
    %v286 = vpop.f32.mrf.mxu0
    %v287 = vadd.f32 %v202, %v286
    %v288 = vpop.f32.mrf.mxu0
    %v289 = vpop.f32.mrf.mxu0
    %v290 = vadd.f32 %v202, %v289
    %v291 = vpop.f32.mrf.mxu0
    %292 = vdwg.mxu0
    %293 = vst [vmem:[#allocation8] sm:$0xff] %v287
    %294 = vst [vmem:[#allocation8 + $0x8] sm:$0xff] %v290
    // Predicated region
    $region34: #{tpu_custom_call.1} parent=1 // pred_check
      _
    $region35: #{tpu_custom_call.1} parent=1 // pred_check_branch
      %296 = sbr.rel (0) target = $region37
    $region36: #{tpu_custom_call.1} parent=1 // pred_region
      %s298 = ssub.s32 256, 256
      %299 = vsyncadd [#allocation4], %s298
      %s300 = sshll.u32 [#allocation8], 4
      %s301 = int_to_ptr.vmem [resolvable:$true] %s300
      %306 = dma.vmem_to_hbm [thread:$0]  %s301, 256, %s5, [#allocation4], 128, 128, 8
    $region37: #{tpu_custom_call.1} parent=1 // pred_fallthru
      _
    // Predicated region
    $region38: #{tpu_custom_call.1} parent=1 // pred_check
      _
    $region39: #{tpu_custom_call.1} parent=1 // pred_check_branch
      %308 = sbr.rel (0) target = $region41
    $region40: #{tpu_custom_call.1} parent=1 // pred_region
      %309 = dma.done [#allocation4], 256
    $region41: #{tpu_custom_call.1} parent=1 // pred_fallthru
      _
    %310 = vsyncpa [#allocation3], 1
    %311 = vsyncpa [#allocation6], 1
    %312 = vsyncpa [#allocation4], 1

</llo_original>
